<compile_context>
chip_gen: v5e
topology: v5e:2x2
jax: 0.10.0
libtpu: 0.0.40
codegen_flags: <defaults>
</compile_context>

<pallas_src>
import jax
import jax.numpy as jnp
from jax.experimental import pallas as pl
from jax.experimental.pallas import tpu as pltpu


def channel_attention_kernel(x_ref, w1_ref, w2_ref, o_ref):
    """One batch block per grid step.

    x_ref  : (bn, C, HW)  input, spatial flattened into the lane dimension
    w1_ref : (C, C_r)     f1 weight in matmul form (right-multiply)
    w2_ref : (C_r, C)     f2 weight in matmul form
    o_ref  : (bn, 1, C)   per-channel attention weights (sigmoid output)
    """
    x = x_ref[...].astype(jnp.float32)               # (bn, C, HW)
    bn, c, hw = x.shape
    inv_hw = 1.0 / float(hw)                         # compile-time constant

    # Global average / max pooling: reduce the lane-dense spatial axis (XLU).
    avg = jnp.sum(x, axis=-1) * inv_hw               # (bn, C)
    mx = jnp.max(x, axis=-1)                         # (bn, C)

    w1 = w1_ref[...].astype(jnp.float32)             # (C, C_r)
    w2 = w2_ref[...].astype(jnp.float32)             # (C_r, C)

    # f1 (1x1 conv) + ReLU on both pooled vectors, then fold the final add
    # through the linear, bias-free f2:  f2(a) + f2(b) == (a + b) @ W2.
    h = (jnp.maximum(jnp.dot(avg, w1, preferred_element_type=jnp.float32), 0.0)
         + jnp.maximum(jnp.dot(mx, w1, preferred_element_type=jnp.float32), 0.0))
    y = jnp.dot(h, w2, preferred_element_type=jnp.float32)   # (bn, C)

    # sigmoid: exp + reciprocal both ride the EUP slot.
    out = 1.0 / (1.0 + jnp.exp(-y))
    o_ref[...] = out.reshape(bn, 1, c).astype(o_ref.dtype)


def channel_attention_pallas(x_nchw, w1, w2, *, block_n=None):
    """x_nchw: (N, C, H, W).  Returns (N, C, 1, 1) channel-attention weights.

    w1: (C, C_r) matmul-form weight of f1 (= f1.weight[:, :, 0, 0].T)
    w2: (C_r, C) matmul-form weight of f2 (= f2.weight[:, :, 0, 0].T)
    """
    N, C, H, W = x_nchw.shape
    HW = H * W
    C_r = w1.shape[1]

    # Free reshape: NCHW -> (N, C, H*W); the large spatial axis becomes the
    # lane (last) dimension.
    x_ncp = x_nchw.reshape(N, C, HW)

    if block_n is None:
        # Whole batch per grid step when it fits; otherwise size the batch
        # block so double-buffered input blocks stay well inside VMEM
        # (budget 8 MiB across the two input buffers; comfortably under the
        # 32 MiB scoped default on v5e/v6e/v7x).
        per_image_bytes = C * HW * x_ncp.dtype.itemsize
        block_n = max(1, min(N, (8 << 20) // (2 * max(per_image_bytes, 1))))
    grid = (pl.cdiv(N, block_n),)

    out_3d = pl.pallas_call(
        channel_attention_kernel,
        out_shape=jax.ShapeDtypeStruct((N, 1, C), x_nchw.dtype),
        grid_spec=pltpu.PrefetchScalarGridSpec(
            num_scalar_prefetch=0,
            grid=grid,
            in_specs=[
                # Last two dims of each block equal the full array dims, so
                # the (8, 128) tiling constraint is satisfied for any C/HW.
                pl.BlockSpec((block_n, C, HW), lambda n: (n, 0, 0)),
                pl.BlockSpec((C, C_r), lambda n: (0, 0)),
                pl.BlockSpec((C_r, C), lambda n: (0, 0)),
            ],
            out_specs=pl.BlockSpec((block_n, 1, C), lambda n: (n, 0, 0)),
        ),
        compiler_params=pltpu.CompilerParams(
            # Batch blocks are independent -> shard across v7x's 2 TCs;
            # neutral on single-TC v5e/v6e.
            dimension_semantics=("parallel",)),
    )(x_ncp, w1, w2)

    return out_3d.reshape(N, C, 1, 1)


def channel_attention_reference(x_nchw, w1_pt, w2_pt):
    """Pure-JAX reference mirroring the PyTorch module (eval semantics)."""
    avg = jnp.mean(x_nchw, axis=(2, 3))              # (N, C)
    mx = jnp.max(x_nchw, axis=(2, 3))                # (N, C)
    w1 = w1_pt[:, :, 0, 0]                           # (C_r, C)
    w2 = w2_pt[:, :, 0, 0]                           # (C, C_r)

    def mlp(v):
        return jnp.maximum(v @ w1.T, 0.0) @ w2.T

    out = jax.nn.sigmoid(mlp(avg) + mlp(mx))         # (N, C)
    return out.reshape(x_nchw.shape[0], x_nchw.shape[1], 1, 1)


if __name__ == "__main__":
    # Module config: ChannelAttention(in_planes=64, ratio=16) -> hidden = 4.
    N, C, H, W = 2, 64, 16, 16
    RATIO = 16
    C_R = C // RATIO  # 4

    key = jax.random.PRNGKey(0)
    k_x, k_w1, k_w2 = jax.random.split(key, 3)

    # Input (PyTorch NCHW convention).
    x_nchw = jax.random.normal(k_x, (N, C, H, W), jnp.float32)

    # Synthetic parameters with PyTorch weight shapes (1x1 convs, no bias).
    w1_pt = 0.2 * jax.random.normal(k_w1, (C_R, C, 1, 1), jnp.float32)  # f1.weight
    w2_pt = 0.2 * jax.random.normal(k_w2, (C, C_R, 1, 1), jnp.float32)  # f2.weight

    # Re-layout 1x1 conv weights into matmul form for the kernel:
    #   f1: (C_r, C, 1, 1) -> (C, C_r),   f2: (C, C_r, 1, 1) -> (C_r, C)
    w1 = jnp.transpose(w1_pt[:, :, 0, 0], (1, 0))
    w2 = jnp.transpose(w2_pt[:, :, 0, 0], (1, 0))

    out = channel_attention_pallas(x_nchw, w1, w2)
    jax.block_until_ready(out)

    # Correctness check vs a pure-JAX reference.
    ref = channel_attention_reference(x_nchw, w1_pt, w2_pt)
    assert out.shape == (N, C, 1, 1)
    assert jnp.allclose(out, ref, atol=1e-5, rtol=1e-5), \
        float(jnp.max(jnp.abs(out - ref)))

    print("KERNEL_OK")
</pallas_src>

<mosaic_0001>
module attributes {stable_mosaic.version = 11 : i64} {
  func.func @channel_attention_kernel(%arg0: i32, %arg1: memref<2x64x256xf32, #tpu.memory_space<vmem>>, %arg2: memref<64x4xf32, #tpu.memory_space<vmem>>, %arg3: memref<4x64xf32, #tpu.memory_space<vmem>>, %arg4: memref<2x1x64xf32, #tpu.memory_space<vmem>>) attributes {dimension_semantics = [#tpu.dimension_semantics<parallel>], iteration_bounds = array<i64: 1>, scalar_prefetch = 0 : i64, scratch_operands = 0 : i64, tpu.core_type = #tpu.core_type<tc>, window_params = [{transform_indices = @transform_0, window_bounds = array<i64: 2, 64, 256>}, {pipeline_mode = #tpu.pipeline_mode<synchronous>, transform_indices = @transform_1, window_bounds = array<i64: 64, 4>}, {pipeline_mode = #tpu.pipeline_mode<synchronous>, transform_indices = @transform_2, window_bounds = array<i64: 4, 64>}, {transform_indices = @transform_3, window_bounds = array<i64: 2, 1, 64>}]} {
    %c0 = arith.constant 0 : index
    %c0_0 = arith.constant 0 : index
    %c0_1 = arith.constant 0 : index
    %0 = vector.load %arg1[%c0, %c0_0, %c0_1] : memref<2x64x256xf32, #tpu.memory_space<vmem>>, vector<2x64x256xf32>
    %cst = arith.constant dense<0.000000e+00> : vector<2x64xf32>
    %1 = vector.multi_reduction <add>, %0, %cst [2] : vector<2x64x256xf32> to vector<2x64xf32>
    %cst_2 = arith.constant 3.906250e-03 : f32
    %2 = vector.broadcast %cst_2 : f32 to vector<2x64xf32>
    %3 = arith.mulf %1, %2 : vector<2x64xf32>
    %cst_3 = arith.constant dense<0xFF800000> : vector<2x64xf32>
    %4 = vector.multi_reduction <maximumf>, %0, %cst_3 [2] : vector<2x64x256xf32> to vector<2x64xf32>
    %c0_4 = arith.constant 0 : index
    %c0_5 = arith.constant 0 : index
    %5 = vector.load %arg2[%c0_4, %c0_5] : memref<64x4xf32, #tpu.memory_space<vmem>>, vector<64x4xf32>
    %c0_6 = arith.constant 0 : index
    %c0_7 = arith.constant 0 : index
    %6 = vector.load %arg3[%c0_6, %c0_7] : memref<4x64xf32, #tpu.memory_space<vmem>>, vector<4x64xf32>
    %cst_8 = arith.constant dense<0.000000e+00> : vector<2x4xf32>
    %7 = tpu.matmul %3, %5, %cst_8 {dimension_numbers = #tpu.dot_dimension_numbers<[1], [0], [0], [1], [0, 0, 1, 1], [], []>} : vector<2x64xf32>, vector<64x4xf32>, vector<2x4xf32> -> vector<2x4xf32>
    %cst_9 = arith.constant 0.000000e+00 : f32
    %8 = vector.broadcast %cst_9 : f32 to vector<2x4xf32>
    %9 = arith.maximumf %7, %8 : vector<2x4xf32>
    %cst_10 = arith.constant dense<0.000000e+00> : vector<2x4xf32>
    %10 = tpu.matmul %4, %5, %cst_10 {dimension_numbers = #tpu.dot_dimension_numbers<[1], [0], [0], [1], [0, 0, 1, 1], [], []>} : vector<2x64xf32>, vector<64x4xf32>, vector<2x4xf32> -> vector<2x4xf32>
    %cst_11 = arith.constant 0.000000e+00 : f32
    %11 = vector.broadcast %cst_11 : f32 to vector<2x4xf32>
    %12 = arith.maximumf %10, %11 : vector<2x4xf32>
    %13 = arith.addf %9, %12 : vector<2x4xf32>
    %cst_12 = arith.constant dense<0.000000e+00> : vector<2x64xf32>
    %14 = tpu.matmul %13, %6, %cst_12 {dimension_numbers = #tpu.dot_dimension_numbers<[1], [0], [0], [1], [0, 0, 1, 1], [], []>} : vector<2x4xf32>, vector<4x64xf32>, vector<2x64xf32> -> vector<2x64xf32>
    %cst_13 = arith.constant 0.000000e+00 : f32
    %15 = vector.broadcast %cst_13 : f32 to vector<2x64xf32>
    %16 = arith.subf %15, %14 : vector<2x64xf32>
    %17 = math.exp %16 : vector<2x64xf32>
    %cst_14 = arith.constant 1.000000e+00 : f32
    %18 = vector.broadcast %cst_14 : f32 to vector<2x64xf32>
    %19 = arith.addf %18, %17 : vector<2x64xf32>
    %cst_15 = arith.constant 1.000000e+00 : f32
    %20 = vector.broadcast %cst_15 : f32 to vector<2x64xf32>
    %21 = arith.divf %20, %19 : vector<2x64xf32>
    %22 = vector.shape_cast %21 : vector<2x64xf32> to vector<2x1x64xf32>
    %c0_16 = arith.constant 0 : index
    %c0_17 = arith.constant 0 : index
    %c0_18 = arith.constant 0 : index
    %23 = vector.load %arg4[%c0_16, %c0_17, %c0_18] : memref<2x1x64xf32, #tpu.memory_space<vmem>>, vector<2x1x64xf32>
    tpu.vector_store %arg4[%c0_16, %c0_17, %c0_18], %22 {strides = array<i32>} : memref<2x1x64xf32, #tpu.memory_space<vmem>>, vector<2x1x64xf32>,
    return
  }
  func.func @transform_0(%arg0: i32) -> (i32, i32, i32) {
    %c0_i32 = arith.constant 0 : i32
    %c0_i32_0 = arith.constant 0 : i32
    %c0_i32_1 = arith.constant 0 : i32
    return %arg0, %c0_i32, %c0_i32_0 : i32, i32, i32
  }
  func.func @transform_1(%arg0: i32) -> (i32, i32) {
    %c0_i32 = arith.constant 0 : i32
    %c0_i32_0 = arith.constant 0 : i32
    %c0_i32_1 = arith.constant 0 : i32
    return %c0_i32, %c0_i32_0 : i32, i32
  }
  func.func @transform_2(%arg0: i32) -> (i32, i32) {
    %c0_i32 = arith.constant 0 : i32
    %c0_i32_0 = arith.constant 0 : i32
    %c0_i32_1 = arith.constant 0 : i32
    return %c0_i32, %c0_i32_0 : i32, i32
  }
  func.func @transform_3(%arg0: i32) -> (i32, i32, i32) {
    %c0_i32 = arith.constant 0 : i32
    %c0_i32_0 = arith.constant 0 : i32
    %c0_i32_1 = arith.constant 0 : i32
    return %arg0, %c0_i32, %c0_i32_0 : i32, i32, i32
  }
}

</mosaic_0001>

<llo_original>
// kernel: tpu_custom_call.1
$region0: #{tpu_custom_call.1}
  #allocation0 [shape = 'u32[]', space=smem, size = 0x4, offset = 0x4, fixed_abs, tag = 'smem constant byte address 0x4 - core index']
  #allocation1 [shape = 'u32[72,128]{1,0:T(1,128)}', space=vmem, size = 0x9000, scoped, tag = 'internal scratch']
  %s0 = inlined_call_operand.hbm [shape: f32[2,64,256], index: 0, kind: input, shape index: {}]
  %s1 = inlined_call_operand.vmem [shape: f32[64,4], index: 1, kind: input, shape index: {}]
  %s2 = inlined_call_operand.vmem [shape: f32[4,64], index: 2, kind: input, shape index: {}]
  %s3 = inlined_call_operand.hbm [shape: f32[2,1,64], index: 3, kind: output, shape index: {}]
  %s4 = sld [smem:[#allocation0]]
  $region26: #{tpu_custom_call.1} parent=0
    _
  %s6 = ssub.s32 1, %s4
  %s7 = scalar_select 0, %s6, %s4
  $region1: #{tpu_custom_call.1} parent=0
    #allocation2 [shape = 'u8[131072]{0}', space=vmem, size = 0x20000, scoped, tag = 'input window, operand 0, single buffered']
    #allocation3 [shape = 's32[1]{0}', space=sflag, size = 0x4, scoped, tag = 'scoped memory for tpu_custom_call.1']
    #allocation4 [shape = 's32[1]{0}', space=sflag, size = 0x4, scoped, tag = 'scoped memory for tpu_custom_call.1']
    #allocation5 [shape = 'u8[1024]{0}', space=vmem, size = 0x400, scoped, tag = 'output window, operand 0, single buffered']
    %8 = vsyncpa [#allocation3], 0
    %9 = vsyncpa [#allocation4], 0
    // Predicated region
    $region2: #{tpu_custom_call.1} parent=1 // pred_check
      _
    $region3: #{tpu_custom_call.1} parent=1 // pred_check_branch
      %11 = sbr.rel (0) target = $region5
    $region4: #{tpu_custom_call.1} parent=1 // pred_region
      %13 = vsyncadd [#allocation3], 0
      %s14 = sshll.u32 %s0, 4
      %s15 = int_to_ptr.hbm [resolvable:$true] %s14
      %s16 = sshll.u32 [#allocation2], 4
      %s17 = int_to_ptr.vmem [resolvable:$true] %s16
      %22 = dma.hbm_to_vmem [thread:$0]  %s15, 4096, %s17, [#allocation3], 256, 256, 16
    $region5: #{tpu_custom_call.1} parent=1 // pred_fallthru
      _
    // Predicated region
    $region6: #{tpu_custom_call.1} parent=1 // pred_check
      _
    $region7: #{tpu_custom_call.1} parent=1 // pred_check_branch
      %24 = sbr.rel (0) target = $region9
    $region8: #{tpu_custom_call.1} parent=1 // pred_region
      _
    $region9: #{tpu_custom_call.1} parent=1 // pred_fallthru
      _
    // Predicated region
    $region10: #{tpu_custom_call.1} parent=1 // pred_check
      _
    $region11: #{tpu_custom_call.1} parent=1 // pred_check_branch
      %26 = sbr.rel (0) target = $region13
    $region12: #{tpu_custom_call.1} parent=1 // pred_region
      _
    $region13: #{tpu_custom_call.1} parent=1 // pred_fallthru
      _
    // Predicated region
    $region14: #{tpu_custom_call.1} parent=1 // pred_check
      _
    $region15: #{tpu_custom_call.1} parent=1 // pred_check_branch
      %28 = sbr.rel (0) target = $region17
    $region16: #{tpu_custom_call.1} parent=1 // pred_region
      %30 = dma.done [#allocation3], 4096
    $region17: #{tpu_custom_call.1} parent=1 // pred_fallthru
      _
    %v31 = vld [vmem:[#allocation2] sm:$0xff]
    %v32 = vld [vmem:[#allocation2 + $0x8] sm:$0xff]
    %v33 = vld [vmem:[#allocation2 + $0x10] sm:$0xff]
    %v34 = vld [vmem:[#allocation2 + $0x18] sm:$0xff]
    %v35 = vld [vmem:[#allocation2 + $0x20] sm:$0xff]
    %v36 = vld [vmem:[#allocation2 + $0x28] sm:$0xff]
    %v37 = vld [vmem:[#allocation2 + $0x30] sm:$0xff]
    %v38 = vld [vmem:[#allocation2 + $0x38] sm:$0xff]
    %v39 = vld [vmem:[#allocation2 + $0x40] sm:$0xff]
    %v40 = vld [vmem:[#allocation2 + $0x48] sm:$0xff]
    %v41 = vld [vmem:[#allocation2 + $0x50] sm:$0xff]
    %v42 = vld [vmem:[#allocation2 + $0x58] sm:$0xff]
    %v43 = vld [vmem:[#allocation2 + $0x60] sm:$0xff]
    %v44 = vld [vmem:[#allocation2 + $0x68] sm:$0xff]
    %v45 = vld [vmem:[#allocation2 + $0x70] sm:$0xff]
    %v46 = vld [vmem:[#allocation2 + $0x78] sm:$0xff]
    %v47 = vld [vmem:[#allocation2 + $0x80] sm:$0xff]
    %v48 = vld [vmem:[#allocation2 + $0x88] sm:$0xff]
    %v49 = vld [vmem:[#allocation2 + $0x90] sm:$0xff]
    %v50 = vld [vmem:[#allocation2 + $0x98] sm:$0xff]
    %v51 = vld [vmem:[#allocation2 + $0xa0] sm:$0xff]
    %v52 = vld [vmem:[#allocation2 + $0xa8] sm:$0xff]
    %v53 = vld [vmem:[#allocation2 + $0xb0] sm:$0xff]
    %v54 = vld [vmem:[#allocation2 + $0xb8] sm:$0xff]
    %v55 = vld [vmem:[#allocation2 + $0xc0] sm:$0xff]
    %v56 = vld [vmem:[#allocation2 + $0xc8] sm:$0xff]
    %v57 = vld [vmem:[#allocation2 + $0xd0] sm:$0xff]
    %v58 = vld [vmem:[#allocation2 + $0xd8] sm:$0xff]
    %v59 = vld [vmem:[#allocation2 + $0xe0] sm:$0xff]
    %v60 = vld [vmem:[#allocation2 + $0xe8] sm:$0xff]
    %v61 = vld [vmem:[#allocation2 + $0xf0] sm:$0xff]
    %v62 = vld [vmem:[#allocation2 + $0xf8] sm:$0xff]
    %v63 = vadd.f32 %v31, %v32
    %64 = vadd.xlane.f32.xlu0 %v63
    %v65 = vpop.xlane.xlu0 %64
    %v66 = vadd.f32 %v33, %v34
    %67 = vadd.xlane.f32.xlu0 %v66
    %v68 = vpop.xlane.xlu0 %67
    %v69 = vadd.f32 %v35, %v36
    %70 = vadd.xlane.f32.xlu0 %v69
    %v71 = vpop.xlane.xlu0 %70
    %v72 = vadd.f32 %v37, %v38
    %73 = vadd.xlane.f32.xlu0 %v72
    %v74 = vpop.xlane.xlu0 %73
    %v75 = vadd.f32 %v39, %v40
    %76 = vadd.xlane.f32.xlu0 %v75
    %v77 = vpop.xlane.xlu0 %76
    %v78 = vadd.f32 %v41, %v42
    %79 = vadd.xlane.f32.xlu0 %v78
    %v80 = vpop.xlane.xlu0 %79
    %v81 = vadd.f32 %v43, %v44
    %82 = vadd.xlane.f32.xlu0 %v81
    %v83 = vpop.xlane.xlu0 %82
    %v84 = vadd.f32 %v45, %v46
    %85 = vadd.xlane.f32.xlu0 %v84
    %v86 = vpop.xlane.xlu0 %85
    %v87 = vadd.f32 %v47, %v48
    %88 = vadd.xlane.f32.xlu0 %v87
    %v89 = vpop.xlane.xlu0 %88
    %v90 = vadd.f32 %v49, %v50
    %91 = vadd.xlane.f32.xlu0 %v90
    %v92 = vpop.xlane.xlu0 %91
    %v93 = vadd.f32 %v51, %v52
    %94 = vadd.xlane.f32.xlu0 %v93
    %v95 = vpop.xlane.xlu0 %94
    %v96 = vadd.f32 %v53, %v54
    %97 = vadd.xlane.f32.xlu0 %v96
    %v98 = vpop.xlane.xlu0 %97
    %v99 = vadd.f32 %v55, %v56
    %100 = vadd.xlane.f32.xlu0 %v99
    %v101 = vpop.xlane.xlu0 %100
    %v102 = vadd.f32 %v57, %v58
    %103 = vadd.xlane.f32.xlu0 %v102
    %v104 = vpop.xlane.xlu0 %103
    %v105 = vadd.f32 %v59, %v60
    %106 = vadd.xlane.f32.xlu0 %v105
    %v107 = vpop.xlane.xlu0 %106
    %v108 = vadd.f32 %v61, %v62
    %109 = vadd.xlane.f32.xlu0 %v108
    %v110 = vpop.xlane.xlu0 %109
    %v111 = vmul.f32 %v65, 0.00390625
    %v112 = vmul.f32 %v68, 0.00390625
    %v113 = vmul.f32 %v71, 0.00390625
    %v114 = vmul.f32 %v74, 0.00390625
    %v115 = vmul.f32 %v77, 0.00390625
    %v116 = vmul.f32 %v80, 0.00390625
    %v117 = vmul.f32 %v83, 0.00390625
    %v118 = vmul.f32 %v86, 0.00390625
    %v119 = vmul.f32 %v89, 0.00390625
    %v120 = vmul.f32 %v92, 0.00390625
    %v121 = vmul.f32 %v95, 0.00390625
    %v122 = vmul.f32 %v98, 0.00390625
    %v123 = vmul.f32 %v101, 0.00390625
    %v124 = vmul.f32 %v104, 0.00390625
    %v125 = vmul.f32 %v107, 0.00390625
    %v126 = vmul.f32 %v110, 0.00390625
    %v127 = vmax.f32 %v31, %v32
    %128 = vmax.xlane.f32.xlu0 %v127
    %v129 = vpop.xlane.xlu0 %128
    %v130 = vmax.f32 %v33, %v34
    %131 = vmax.xlane.f32.xlu0 %v130
    %v132 = vpop.xlane.xlu0 %131
    %v133 = vmax.f32 %v35, %v36
    %134 = vmax.xlane.f32.xlu0 %v133
    %v135 = vpop.xlane.xlu0 %134
    %v136 = vmax.f32 %v37, %v38
    %137 = vmax.xlane.f32.xlu0 %v136
    %v138 = vpop.xlane.xlu0 %137
    %v139 = vmax.f32 %v39, %v40
    %140 = vmax.xlane.f32.xlu0 %v139
    %v141 = vpop.xlane.xlu0 %140
    %v142 = vmax.f32 %v41, %v42
    %143 = vmax.xlane.f32.xlu0 %v142
    %v144 = vpop.xlane.xlu0 %143
    %v145 = vmax.f32 %v43, %v44
    %146 = vmax.xlane.f32.xlu0 %v145
    %v147 = vpop.xlane.xlu0 %146
    %v148 = vmax.f32 %v45, %v46
    %149 = vmax.xlane.f32.xlu0 %v148
    %v150 = vpop.xlane.xlu0 %149
    %v151 = vmax.f32 %v47, %v48
    %152 = vmax.xlane.f32.xlu0 %v151
    %v153 = vpop.xlane.xlu0 %152
    %v154 = vmax.f32 %v49, %v50
    %155 = vmax.xlane.f32.xlu0 %v154
    %v156 = vpop.xlane.xlu0 %155
    %v157 = vmax.f32 %v51, %v52
    %158 = vmax.xlane.f32.xlu0 %v157
    %v159 = vpop.xlane.xlu0 %158
    %v160 = vmax.f32 %v53, %v54
    %161 = vmax.xlane.f32.xlu0 %v160
    %v162 = vpop.xlane.xlu0 %161
    %v163 = vmax.f32 %v55, %v56
    %164 = vmax.xlane.f32.xlu0 %v163
    %v165 = vpop.xlane.xlu0 %164
    %v166 = vmax.f32 %v57, %v58
    %167 = vmax.xlane.f32.xlu0 %v166
    %v168 = vpop.xlane.xlu0 %167
    %v169 = vmax.f32 %v59, %v60
    %170 = vmax.xlane.f32.xlu0 %v169
    %v171 = vpop.xlane.xlu0 %170
    %v172 = vmax.f32 %v61, %v62
    %173 = vmax.xlane.f32.xlu0 %v172
    %v174 = vpop.xlane.xlu0 %173
    %v175 = vld [vmem:[%s1] sm:$0xff]
    %v176 = vld [vmem:[%s1 + $0x8] sm:$0xff]
    %v177 = vld [vmem:[%s1 + $0x10] sm:$0xff]
    %v178 = vld [vmem:[%s1 + $0x18] sm:$0xff]
    %v179 = vld [vmem:[%s1 + $0x20] sm:$0xff]
    %v180 = vld [vmem:[%s1 + $0x28] sm:$0xff]
    %v181 = vld [vmem:[%s1 + $0x30] sm:$0xff]
    %v182 = vld [vmem:[%s1 + $0x38] sm:$0xff]
    %v183 = vld [vmem:[%s2] sm:$0xf]
    %v200 = vlaneseq
    %v201 = vand.u32 %v200, 127
    %v202 = vperm.slane %v111, %v201
    %v203 = vadd.s32 %v201, 4294967288
    %v204 = vperm.slane %v112, %v203
    %vm205 = vcmask 130112
    %v206 = vsel %vm205, %v204, %v202
    %v207 = vadd.s32 %v201, 4294967280
    %v208 = vperm.slane %v113, %v207
    %vm209 = vcmask 195712
    %v210 = vsel %vm209, %v208, %v206
    %v211 = vadd.s32 %v201, 4294967272
    %v212 = vperm.slane %v114, %v211
    %vm213 = vcmask 261312
    %v214 = vsel %vm213, %v212, %v210
    %v215 = vadd.s32 %v201, 4294967264
    %v216 = vperm.slane %v115, %v215
    %vm217 = vcmask 326912
    %v218 = vsel %vm217, %v216, %v214
    %v219 = vadd.s32 %v201, 4294967256
    %v220 = vperm.slane %v116, %v219
    %vm221 = vcmask 392512
    %v222 = vsel %vm221, %v220, %v218
    %v223 = vadd.s32 %v201, 4294967248
    %v224 = vperm.slane %v117, %v223
    %vm225 = vcmask 458112
    %v226 = vsel %vm225, %v224, %v222
    %v227 = vadd.s32 %v201, 4294967240
    %v228 = vperm.slane %v118, %v227
    %vm229 = vcmask 523712
    %v230 = vsel %vm229, %v228, %v226
    %v231 = vperm.slane %v119, %v201
    %v232 = vperm.slane %v120, %v203
    %v233 = vsel %vm205, %v232, %v231
    %v234 = vperm.slane %v121, %v207
    %v235 = vsel %vm209, %v234, %v233
    %v236 = vperm.slane %v122, %v211
    %v237 = vsel %vm213, %v236, %v235
    %v238 = vperm.slane %v123, %v215
    %v239 = vsel %vm217, %v238, %v237
    %v240 = vperm.slane %v124, %v219
    %v241 = vsel %vm221, %v240, %v239
    %v242 = vperm.slane %v125, %v223
    %v243 = vsel %vm225, %v242, %v241
    %v244 = vperm.slane %v126, %v227
    %v245 = vsel %vm229, %v244, %v243
    %vm246 = vcmask 1041409
    %v247 = vsel %vm246, %v245, %v230
    %vm248 = vcmask 523264
    %v249 = vsel %vm248, %v247, 0
    %251 = vmatpush.msra.mxu0 0.0
    %252 = vmatpush.msra.mxu0 0.0
    %253 = vmatpush.msra.mxu0 0.0
    %254 = vmatpush.msra.mxu0 0.0
    %255 = vmatpush.msra.mxu0 0.0
    %256 = vmatpush.msra.mxu0 0.0
    %257 = vmatpush.msra.mxu0 0.0
    %258 = vmatpush.msra.mxu0 0.0
    %259 = vmatpush.msra.mxu0 %v182
    %260 = vmatpush.msra.mxu0 %v181
    %261 = vmatpush.msra.mxu0 %v180
    %262 = vmatpush.msra.mxu0 %v179
    %263 = vmatpush.msra.mxu0 %v178
    %264 = vmatpush.msra.mxu0 %v177
    %265 = vmatpush.msra.mxu0 %v176
    %266 = vmatpush.msra.mxu0 %v175
    %267 = vmatmul.f32.gmra.mxu0 %v249
    %v268 = vpop.f32.mrf.mxu0
    %v269 = vadd.f32 0.0, %v268
    %270 = vdwg.mxu0
    %v271 = vmax.f32 %v269, 0.0
    %v288 = vperm.slane %v129, %v201
    %v289 = vperm.slane %v132, %v203
    %v290 = vsel %vm205, %v289, %v288
    %v291 = vperm.slane %v135, %v207
    %v292 = vsel %vm209, %v291, %v290
    %v293 = vperm.slane %v138, %v211
    %v294 = vsel %vm213, %v293, %v292
    %v295 = vperm.slane %v141, %v215
    %v296 = vsel %vm217, %v295, %v294
    %v297 = vperm.slane %v144, %v219
    %v298 = vsel %vm221, %v297, %v296
    %v299 = vperm.slane %v147, %v223
    %v300 = vsel %vm225, %v299, %v298
    %v301 = vperm.slane %v150, %v227
    %v302 = vsel %vm229, %v301, %v300
    %v303 = vperm.slane %v153, %v201
    %v304 = vperm.slane %v156, %v203
    %v305 = vsel %vm205, %v304, %v303
    %v306 = vperm.slane %v159, %v207
    %v307 = vsel %vm209, %v306, %v305
    %v308 = vperm.slane %v162, %v211
    %v309 = vsel %vm213, %v308, %v307
    %v310 = vperm.slane %v165, %v215
    %v311 = vsel %vm217, %v310, %v309
    %v312 = vperm.slane %v168, %v219
    %v313 = vsel %vm221, %v312, %v311
    %v314 = vperm.slane %v171, %v223
    %v315 = vsel %vm225, %v314, %v313
    %v316 = vperm.slane %v174, %v227
    %v317 = vsel %vm229, %v316, %v315
    %v318 = vsel %vm246, %v317, %v302
    %v319 = vsel %vm248, %v318, 0
    %321 = vmatpush.msra.mxu0 0.0
    %322 = vmatpush.msra.mxu0 0.0
    %323 = vmatpush.msra.mxu0 0.0
    %324 = vmatpush.msra.mxu0 0.0
    %325 = vmatpush.msra.mxu0 0.0
    %326 = vmatpush.msra.mxu0 0.0
    %327 = vmatpush.msra.mxu0 0.0
    %328 = vmatpush.msra.mxu0 0.0
    %329 = vmatpush.msra.mxu0 %v182
    %330 = vmatpush.msra.mxu0 %v181
    %331 = vmatpush.msra.mxu0 %v180
    %332 = vmatpush.msra.mxu0 %v179
    %333 = vmatpush.msra.mxu0 %v178
    %334 = vmatpush.msra.mxu0 %v177
    %335 = vmatpush.msra.mxu0 %v176
    %336 = vmatpush.msra.mxu0 %v175
    %337 = vmatmul.f32.gmra.mxu0 %v319
    %v338 = vpop.f32.mrf.mxu0
    %v339 = vadd.f32 0.0, %v338
    %340 = vdwg.mxu0
    %v341 = vmax.f32 %v339, 0.0
    %v342 = vadd.f32 %v271, %v341
    %vm343 = vcmask 31744
    %v345 = vsel %vm343, %v342, 0
    %vm347 = vcmask 1043456
    %v349 = vsel %vm347, %v183, 0
    %351 = vmatpush.msra.mxu0 0.0
    %352 = vmatpush.msra.mxu0 0.0
    %353 = vmatpush.msra.mxu0 0.0
    %354 = vmatpush.msra.mxu0 0.0
    %355 = vmatpush.msra.mxu0 0.0
    %356 = vmatpush.msra.mxu0 0.0
    %357 = vmatpush.msra.mxu0 0.0
    %358 = vmatpush.msra.mxu0 0.0
    %359 = vmatpush.msra.mxu0 0.0
    %360 = vmatpush.msra.mxu0 0.0
    %361 = vmatpush.msra.mxu0 0.0
    %362 = vmatpush.msra.mxu0 0.0
    %363 = vmatpush.msra.mxu0 0.0
    %364 = vmatpush.msra.mxu0 0.0
    %365 = vmatpush.msra.mxu0 0.0
    %366 = vmatpush.msra.mxu0 %v349
    %367 = vmatmul.f32.gmra.mxu0 %v345
    %v368 = vpop.f32.mrf.mxu0
    %v369 = vadd.f32 0.0, %v368
    %370 = vdwg.mxu0
    %v371 = vsub.f32 0.0, %v369
    %v372 = vmul.f32 %v371, 1.442695
    %v373 = vpow.pop %v372
    %v374 = vadd.f32 %v373, 1.0
    %v375 = vrcp.pop %v374
    %v376 = vmul.f32 %v374, %v375
    %v377 = vsub.f32 1.0, %v376
    %v378 = vmul.f32 %v375, %v377
    %v379 = vadd.f32 %v375, %v378
    %vm380 = vweird.f32 %v374
    %vm381 = vweird.f32 %v375
    %vm382 = vmor %vm380, %vm381
    %v383 = vsel %vm382, %v375, %v379
    %v384 = vand.u32 2147483647, %v374
    %vm385 = vcmp.eq.f32.partialorder %v384, 8.507059e+37
    %v386 = vand.u32 %v374, 2147483648
    %v387 = vor.u32 1.1754944e-38, %v386
    %v388 = vsel %vm385, %v387, %v383
    %v389 = vmul.f32 1.0, %v388
    %v391 = vrot.slane %v389, 1
    %vm393 = vcmask 516096
    %394 = vst.msk [vmem:[#allocation5] sm:$0x1] %vm393, %v389
    %395 = vst.msk [vmem:[#allocation5 + $0x1] sm:$0x1] %vm393, %v391
    // Predicated region
    $region18: #{tpu_custom_call.1} parent=1 // pred_check
      _
    $region19: #{tpu_custom_call.1} parent=1 // pred_check_branch
      %397 = sbr.rel (0) target = $region21
    $region20: #{tpu_custom_call.1} parent=1 // pred_region
      %399 = vsyncadd [#allocation4], 0
      %s400 = sshll.u32 [#allocation5], 4
      %s401 = int_to_ptr.vmem [resolvable:$true] %s400
      %s402 = sshll.u32 %s3, 4
      %s403 = int_to_ptr.hbm [resolvable:$true] %s402
      %408 = dma.vmem_to_hbm [thread:$0]  %s401, 32, %s403, [#allocation4], 16, 16, 1
    $region21: #{tpu_custom_call.1} parent=1 // pred_fallthru
      _
    // Predicated region
    $region22: #{tpu_custom_call.1} parent=1 // pred_check
      _
    $region23: #{tpu_custom_call.1} parent=1 // pred_check_branch
      %410 = sbr.rel (0) target = $region25
    $region24: #{tpu_custom_call.1} parent=1 // pred_region
      %412 = dma.done [#allocation4], 32
    $region25: #{tpu_custom_call.1} parent=1 // pred_fallthru
      _
    %413 = vsyncpa [#allocation3], 1
    %414 = vsyncpa [#allocation4], 1

</llo_original>
